<compile_context>
chip_gen: v7x
topology: tpu7x:2x2x1
jax: 0.10.0
libtpu: 0.0.40
codegen_flags: <defaults>
</compile_context>

<pallas_src>
import math

import jax
import jax.numpy as jnp
from jax.experimental import pallas as pl
from jax.experimental.pallas import tpu as pltpu


def _vmem():
    # whole array resident in VMEM (all shapes here are tiny)
    return pl.BlockSpec(memory_space=pltpu.MemorySpace.VMEM)


def _ru(v, m):
    return ((v + m - 1) // m) * m


# ---------------------------------------------------------------------------
# slab layout: all weights packed into two 2-D slabs, every section starting
# on a sublane (8-row) boundary so static ref slices are alignment-clean.
# ---------------------------------------------------------------------------
def _slab_layout(Lp, H):
    assert Lp % 8 == 0 and H % 8 == 0
    lay = {}
    # gates slab: 4H columns
    lay['enc_wih'] = 0                       # (Lp, 4H)
    lay['enc_whh'] = Lp                      # (H, 4H)
    lay['enc_b'] = Lp + H                    # (1, 4H)  b_ih + b_hh
    lay['dec_whh'] = _ru(lay['enc_b'] + 1, 8)    # (H, 4H)
    lay['dec_wih'] = lay['dec_whh'] + H          # (1, 4H)  input_size = 1
    lay['dec_b'] = _ru(lay['dec_wih'] + 1, 8)    # (1, 4H)
    lay['g_rows'] = _ru(lay['dec_b'] + 1, 8)
    # attention slab: H columns
    lay['w1a'] = 0                           # (H, H)  acts on attn_value
    lay['w1b'] = H                           # (H, H)  acts on dec_h
    lay['b1'] = 2 * H                        # (1, H)
    lay['w2'] = _ru(lay['b1'] + 1, 8)        # (1, H)
    lay['b2'] = _ru(lay['w2'] + 1, 8)        # (1, H)  scalar replicated
    lay['a_rows'] = _ru(lay['b2'] + 1, 8)
    return lay


# ---------------------------------------------------------------------------
# fused forward kernel
# ---------------------------------------------------------------------------
def _make_lstm_dy_kernel(Bp, Lp, T, H):
    """Bp=padded batch, Lp=padded latent_dim, T=#encoder steps, H=hidden_dim."""
    lay = _slab_layout(Lp, H)

    def _lstm_cell(gates, c):
        # Two full-width EUP passes instead of four narrow-slice activations.
        sg = jax.nn.sigmoid(gates)                 # (Bp, 4H)
        tg = jnp.tanh(gates)                       # (Bp, 4H)
        i = sg[:, 0 * H:1 * H]                     # PyTorch gate order i,f,g,o
        f = sg[:, 1 * H:2 * H]
        o = sg[:, 3 * H:4 * H]
        g = tg[:, 2 * H:3 * H]
        c_new = f * c + i * g
        h_new = o * jnp.tanh(c_new)
        return h_new, c_new

    def kernel(x_ref, t_ref, wg_ref, wa_ref, o_ref):
        # ---- static, zero-cost slab slices ----------------------------------
        enc_wih = wg_ref[lay['enc_wih']:lay['enc_wih'] + Lp, :]   # (Lp, 4H)
        enc_whh = wg_ref[lay['enc_whh']:lay['enc_whh'] + H, :]    # (H, 4H)
        enc_b = wg_ref[lay['enc_b']:lay['enc_b'] + 1, :]          # (1, 4H)
        dec_whh = wg_ref[lay['dec_whh']:lay['dec_whh'] + H, :]    # (H, 4H)
        dec_wih = wg_ref[lay['dec_wih']:lay['dec_wih'] + 1, :]    # (1, 4H)
        dec_b = wg_ref[lay['dec_b']:lay['dec_b'] + 1, :]          # (1, 4H)

        # ---- EncoderLSTM -----------------------------------------------------
        # Input projection has no sequential dependence: hoist it out of the
        # recurrence as one (T*Bp, Lp) @ (Lp, 4H) matmul (bias folded in).
        x_proj = (jnp.dot(x_ref[...], enc_wih,
                          preferred_element_type=jnp.float32) + enc_b)   # (T*Bp, 4H)

        h = jnp.zeros((Bp, H), jnp.float32)
        c = jnp.zeros((Bp, H), jnp.float32)
        enc_hs = []
        for step in range(T):               # T is tiny & static -> unroll
            gates = (x_proj[step * Bp:(step + 1) * Bp, :]
                     + jnp.dot(h, enc_whh, preferred_element_type=jnp.float32))
            h, c = _lstm_cell(gates, c)
            enc_hs.append(h)

        # ---- DecoderLSTM: one step, input_size = 1 ---------------------------
        # input projection is a (Bp,1)*(1,4H) broadcast, not a 1-wide matmul
        gates = (t_ref[...] * dec_wih
                 + jnp.dot(h, dec_whh, preferred_element_type=jnp.float32)
                 + dec_b)                                                 # (Bp, 4H)
        dec_h, _ = _lstm_cell(gates, c)                                   # (Bp, H)

        # ---- attention over the T encoder states -----------------------------
        scores = [jnp.sum(eh * dec_h, axis=-1, keepdims=True) for eh in enc_hs]
        m = scores[0]
        for s in scores[1:]:
            m = jnp.maximum(m, s)
        exps = [jnp.exp(s - m) for s in scores]
        denom = exps[0]
        for e in exps[1:]:
            denom = denom + e
        inv = pl.reciprocal(denom, approx=True)                           # (Bp, 1)

        attn_val = jnp.zeros((Bp, H), jnp.float32)
        for e, eh in zip(exps, enc_hs):
            attn_val = attn_val + (e * inv) * eh                          # (Bp, H)

        # ---- Attention MLP: Linear(2H,H) -> tanh -> Linear(H,1) --------------
        w1a = wa_ref[lay['w1a']:lay['w1a'] + H, :]                        # (H, H)
        w1b = wa_ref[lay['w1b']:lay['w1b'] + H, :]                        # (H, H)
        b1 = wa_ref[lay['b1']:lay['b1'] + 1, :]                           # (1, H)
        w2 = wa_ref[lay['w2']:lay['w2'] + 1, :]                           # (1, H)
        b2 = wa_ref[lay['b2']:lay['b2'] + 1, :][:, 0:1]                   # (1, 1)

        # concat([attn_val, dec_h]) @ W1 folded into two (H, H) matmuls
        z = jnp.tanh(jnp.dot(attn_val, w1a, preferred_element_type=jnp.float32)
                     + jnp.dot(dec_h, w1b, preferred_element_type=jnp.float32)
                     + b1)                                                # (Bp, H)
        # Linear(H, 1) as broadcast multiply + lane reduce (avoids 1-lane matmul)
        y = jnp.sum(z * w2, axis=-1, keepdims=True) + b2                  # (Bp, 1)

        # log_softmax over the last dim (size 1 -> identically zero; kept faithful)
        mx = jnp.max(y, axis=-1, keepdims=True)
        lse = mx + jnp.log(jnp.sum(jnp.exp(y - mx), axis=-1, keepdims=True))
        o_ref[...] = y - lse

    return kernel


# ---------------------------------------------------------------------------
# wrapper
# ---------------------------------------------------------------------------
def lstm_dY_forward(x, t, wg, wa, *, hidden_dim):
    """x: (B, latent_dim, T) float;  t: (B,) float.  Returns (B, 1, 1)."""
    B, L, T = x.shape
    H = hidden_dim
    Lp = _ru(L, 128)          # lane-dense latent dim (100 -> 128)
    Bp = _ru(B, 8)            # sublane-aligned batch
    lay = _slab_layout(Lp, H)
    assert wg.shape == (lay['g_rows'], 4 * H)
    assert wa.shape == (lay['a_rows'], H)

    # module does x.permute(2, 0, 1); pad batch/latent and flatten steps
    x_tbl = jnp.transpose(x, (2, 0, 1)).astype(jnp.float32)          # (T, B, L)
    x_tbl = jnp.pad(x_tbl, ((0, 0), (0, Bp - B), (0, Lp - L)))
    x_flat = x_tbl.reshape(T * Bp, Lp)
    t2d = jnp.pad(t.reshape(B, 1).astype(jnp.float32), ((0, Bp - B), (0, 0)))

    kernel = _make_lstm_dy_kernel(Bp, Lp, T, H)
    out = pl.pallas_call(
        kernel,
        out_shape=jax.ShapeDtypeStruct((Bp, 1), jnp.float32),
        in_specs=[_vmem()] * 4,
        out_specs=_vmem(),
    )(x_flat, t2d, wg, wa)
    return out[:B].reshape(B, 1, 1)   # matches Attention(...).forward output (n, 1, 1)


# ---------------------------------------------------------------------------
# deterministic parameter initialization (PyTorch-style uniform scales)
# ---------------------------------------------------------------------------
def init_params(seed, latent_dim, hidden_dim):
    L, H = latent_dim, hidden_dim
    key = jax.random.PRNGKey(seed)
    ks = list(jax.random.split(key, 13))
    kH = 1.0 / math.sqrt(H)
    k2H = 1.0 / math.sqrt(2 * H)

    def uni(k, shape, scale):
        return jax.random.uniform(k, shape, jnp.float32, -scale, scale)

    return {
        # EncoderLSTM: nn.LSTM(input_size=L, hidden=H); weights stored transposed (in, 4H)
        'enc_wih': uni(ks[0], (L, 4 * H), kH),
        'enc_whh': uni(ks[1], (H, 4 * H), kH),
        'enc_b': uni(ks[2], (4 * H,), kH) + uni(ks[3], (4 * H,), kH),   # b_ih + b_hh
        # DecoderLSTM: nn.LSTM(input_size=1, hidden=H)
        'dec_wih': uni(ks[4], (4 * H,), kH),
        'dec_whh': uni(ks[5], (H, 4 * H), kH),
        'dec_b': uni(ks[6], (4 * H,), kH) + uni(ks[7], (4 * H,), kH),
        # Attention: Linear(2H, H) split over concat([attn_value, dec_h]); Linear(H, 1)
        'att_w1a': uni(ks[8], (H, H), k2H),
        'att_w1b': uni(ks[9], (H, H), k2H),
        'att_b1': uni(ks[10], (H,), k2H),
        'att_w2': uni(ks[11], (H,), kH),
        'att_b2': uni(ks[12], (), kH),
    }


def pack_params(params, latent_dim, hidden_dim):
    """Pack the 11 logical tensors into 2 sublane-aligned VMEM slabs."""
    L, H = latent_dim, hidden_dim
    Lp = _ru(L, 128)
    lay = _slab_layout(Lp, H)

    wg = jnp.zeros((lay['g_rows'], 4 * H), jnp.float32)
    wg = wg.at[0:L, :].set(params['enc_wih'])                 # rows L..Lp stay zero
    wg = wg.at[lay['enc_whh']:lay['enc_whh'] + H, :].set(params['enc_whh'])
    wg = wg.at[lay['enc_b'], :].set(params['enc_b'])
    wg = wg.at[lay['dec_whh']:lay['dec_whh'] + H, :].set(params['dec_whh'])
    wg = wg.at[lay['dec_wih'], :].set(params['dec_wih'])
    wg = wg.at[lay['dec_b'], :].set(params['dec_b'])

    wa = jnp.zeros((lay['a_rows'], H), jnp.float32)
    wa = wa.at[lay['w1a']:lay['w1a'] + H, :].set(params['att_w1a'])
    wa = wa.at[lay['w1b']:lay['w1b'] + H, :].set(params['att_w1b'])
    wa = wa.at[lay['b1'], :].set(params['att_b1'])
    wa = wa.at[lay['w2'], :].set(params['att_w2'])
    wa = wa.at[lay['b2'], :].set(params['att_b2'])            # scalar replicated
    return wg, wa


if __name__ == "__main__":
    # small shapes consistent with the module: x (B, latent_dim, T), t (B,)
    B, L, T, H = 8, 100, 4, 32   # batch, latent_dim, encoder steps, hidden_dim

    key = jax.random.PRNGKey(0)
    kx, kt = jax.random.split(key)
    x = jax.random.normal(kx, (B, L, T), jnp.float32)
    t = jax.random.normal(kt, (B,), jnp.float32)

    params = init_params(42, L, H)
    wg, wa = pack_params(params, L, H)

    out = lstm_dY_forward(x, t, wg, wa, hidden_dim=H)
    out = jax.block_until_ready(out)

    assert out.shape == (B, 1, 1)
    assert bool(jnp.all(jnp.isfinite(out)))
    # log_softmax over a size-1 dim => the module's output is identically zero
    assert bool(jnp.all(out == 0.0))
    print("KERNEL_OK")
</pallas_src>

<mosaic_0001>
module attributes {stable_mosaic.version = 11 : i64} {
  func.func @kernel(%arg0: memref<32x128xf32, #tpu.memory_space<vmem>>, %arg1: memref<8x1xf32, #tpu.memory_space<vmem>>, %arg2: memref<216x128xf32, #tpu.memory_space<vmem>>, %arg3: memref<88x32xf32, #tpu.memory_space<vmem>>, %arg4: memref<8x1xf32, #tpu.memory_space<vmem>>) attributes {dimension_semantics = [], scalar_prefetch = 0 : i64, scratch_operands = 0 : i64, tpu.core_type = #tpu.core_type<tc>} {
    %c0 = arith.constant 0 : index
    %c0_0 = arith.constant 0 : index
    %0 = vector.load %arg2[%c0, %c0_0] : memref<216x128xf32, #tpu.memory_space<vmem>>, vector<128x128xf32>
    %c128 = arith.constant 128 : index
    %c0_1 = arith.constant 0 : index
    %1 = vector.load %arg2[%c128, %c0_1] : memref<216x128xf32, #tpu.memory_space<vmem>>, vector<32x128xf32>
    %c160 = arith.constant 160 : index
    %c0_2 = arith.constant 0 : index
    %2 = vector.load %arg2[%c160, %c0_2] : memref<216x128xf32, #tpu.memory_space<vmem>>, vector<1x128xf32>
    %c168 = arith.constant 168 : index
    %c0_3 = arith.constant 0 : index
    %3 = vector.load %arg2[%c168, %c0_3] : memref<216x128xf32, #tpu.memory_space<vmem>>, vector<32x128xf32>
    %c200 = arith.constant 200 : index
    %c0_4 = arith.constant 0 : index
    %4 = vector.load %arg2[%c200, %c0_4] : memref<216x128xf32, #tpu.memory_space<vmem>>, vector<1x128xf32>
    %c208 = arith.constant 208 : index
    %c0_5 = arith.constant 0 : index
    %5 = vector.load %arg2[%c208, %c0_5] : memref<216x128xf32, #tpu.memory_space<vmem>>, vector<1x128xf32>
    %c0_6 = arith.constant 0 : index
    %c0_7 = arith.constant 0 : index
    %6 = vector.load %arg0[%c0_6, %c0_7] : memref<32x128xf32, #tpu.memory_space<vmem>>, vector<32x128xf32>
    %cst = arith.constant dense<0.000000e+00> : vector<32x128xf32>
    %7 = tpu.matmul %6, %0, %cst {dimension_numbers = #tpu.dot_dimension_numbers<[1], [0], [0], [1], [0, 0, 1, 1], [], []>} : vector<32x128xf32>, vector<128x128xf32>, vector<32x128xf32> -> vector<32x128xf32>
    %8 = vector.broadcast %2 : vector<1x128xf32> to vector<32x128xf32>
    %9 = arith.addf %7, %8 : vector<32x128xf32>
    %cst_8 = arith.constant 0.000000e+00 : f32
    %10 = vector.broadcast %cst_8 : f32 to vector<8x32xf32>
    %cst_9 = arith.constant 0.000000e+00 : f32
    %11 = vector.broadcast %cst_9 : f32 to vector<8x32xf32>
    %12 = vector.extract_strided_slice %9 {offsets = [0, 0], sizes = [8, 128], strides = [1, 1]} : vector<32x128xf32> to vector<8x128xf32>
    %cst_10 = arith.constant dense<0.000000e+00> : vector<8x128xf32>
    %13 = tpu.matmul %10, %1, %cst_10 {dimension_numbers = #tpu.dot_dimension_numbers<[1], [0], [0], [1], [0, 0, 1, 1], [], []>} : vector<8x32xf32>, vector<32x128xf32>, vector<8x128xf32> -> vector<8x128xf32>
    %14 = arith.addf %12, %13 : vector<8x128xf32>
    %15 = arith.negf %14 : vector<8x128xf32>
    %16 = math.exp %15 : vector<8x128xf32>
    %cst_11 = arith.constant 1.000000e+00 : f32
    %17 = vector.broadcast %cst_11 : f32 to vector<8x128xf32>
    %18 = arith.addf %17, %16 : vector<8x128xf32>
    %19 = arith.divf %17, %18 : vector<8x128xf32>
    %20 = math.tanh %14 : vector<8x128xf32>
    %21 = vector.extract_strided_slice %19 {offsets = [0, 0], sizes = [8, 32], strides = [1, 1]} : vector<8x128xf32> to vector<8x32xf32>
    %22 = vector.extract_strided_slice %19 {offsets = [0, 32], sizes = [8, 32], strides = [1, 1]} : vector<8x128xf32> to vector<8x32xf32>
    %23 = vector.extract_strided_slice %19 {offsets = [0, 96], sizes = [8, 32], strides = [1, 1]} : vector<8x128xf32> to vector<8x32xf32>
    %24 = vector.extract_strided_slice %20 {offsets = [0, 64], sizes = [8, 32], strides = [1, 1]} : vector<8x128xf32> to vector<8x32xf32>
    %25 = arith.mulf %22, %11 : vector<8x32xf32>
    %26 = arith.mulf %21, %24 : vector<8x32xf32>
    %27 = arith.addf %25, %26 : vector<8x32xf32>
    %28 = math.tanh %27 : vector<8x32xf32>
    %29 = arith.mulf %23, %28 : vector<8x32xf32>
    %30 = vector.extract_strided_slice %9 {offsets = [8, 0], sizes = [8, 128], strides = [1, 1]} : vector<32x128xf32> to vector<8x128xf32>
    %cst_12 = arith.constant dense<0.000000e+00> : vector<8x128xf32>
    %31 = tpu.matmul %29, %1, %cst_12 {dimension_numbers = #tpu.dot_dimension_numbers<[1], [0], [0], [1], [0, 0, 1, 1], [], []>} : vector<8x32xf32>, vector<32x128xf32>, vector<8x128xf32> -> vector<8x128xf32>
    %32 = arith.addf %30, %31 : vector<8x128xf32>
    %33 = arith.negf %32 : vector<8x128xf32>
    %34 = math.exp %33 : vector<8x128xf32>
    %cst_13 = arith.constant 1.000000e+00 : f32
    %35 = vector.broadcast %cst_13 : f32 to vector<8x128xf32>
    %36 = arith.addf %35, %34 : vector<8x128xf32>
    %37 = arith.divf %35, %36 : vector<8x128xf32>
    %38 = math.tanh %32 : vector<8x128xf32>
    %39 = vector.extract_strided_slice %37 {offsets = [0, 0], sizes = [8, 32], strides = [1, 1]} : vector<8x128xf32> to vector<8x32xf32>
    %40 = vector.extract_strided_slice %37 {offsets = [0, 32], sizes = [8, 32], strides = [1, 1]} : vector<8x128xf32> to vector<8x32xf32>
    %41 = vector.extract_strided_slice %37 {offsets = [0, 96], sizes = [8, 32], strides = [1, 1]} : vector<8x128xf32> to vector<8x32xf32>
    %42 = vector.extract_strided_slice %38 {offsets = [0, 64], sizes = [8, 32], strides = [1, 1]} : vector<8x128xf32> to vector<8x32xf32>
    %43 = arith.mulf %40, %27 : vector<8x32xf32>
    %44 = arith.mulf %39, %42 : vector<8x32xf32>
    %45 = arith.addf %43, %44 : vector<8x32xf32>
    %46 = math.tanh %45 : vector<8x32xf32>
    %47 = arith.mulf %41, %46 : vector<8x32xf32>
    %48 = vector.extract_strided_slice %9 {offsets = [16, 0], sizes = [8, 128], strides = [1, 1]} : vector<32x128xf32> to vector<8x128xf32>
    %cst_14 = arith.constant dense<0.000000e+00> : vector<8x128xf32>
    %49 = tpu.matmul %47, %1, %cst_14 {dimension_numbers = #tpu.dot_dimension_numbers<[1], [0], [0], [1], [0, 0, 1, 1], [], []>} : vector<8x32xf32>, vector<32x128xf32>, vector<8x128xf32> -> vector<8x128xf32>
    %50 = arith.addf %48, %49 : vector<8x128xf32>
    %51 = arith.negf %50 : vector<8x128xf32>
    %52 = math.exp %51 : vector<8x128xf32>
    %cst_15 = arith.constant 1.000000e+00 : f32
    %53 = vector.broadcast %cst_15 : f32 to vector<8x128xf32>
    %54 = arith.addf %53, %52 : vector<8x128xf32>
    %55 = arith.divf %53, %54 : vector<8x128xf32>
    %56 = math.tanh %50 : vector<8x128xf32>
    %57 = vector.extract_strided_slice %55 {offsets = [0, 0], sizes = [8, 32], strides = [1, 1]} : vector<8x128xf32> to vector<8x32xf32>
    %58 = vector.extract_strided_slice %55 {offsets = [0, 32], sizes = [8, 32], strides = [1, 1]} : vector<8x128xf32> to vector<8x32xf32>
    %59 = vector.extract_strided_slice %55 {offsets = [0, 96], sizes = [8, 32], strides = [1, 1]} : vector<8x128xf32> to vector<8x32xf32>
    %60 = vector.extract_strided_slice %56 {offsets = [0, 64], sizes = [8, 32], strides = [1, 1]} : vector<8x128xf32> to vector<8x32xf32>
    %61 = arith.mulf %58, %45 : vector<8x32xf32>
    %62 = arith.mulf %57, %60 : vector<8x32xf32>
    %63 = arith.addf %61, %62 : vector<8x32xf32>
    %64 = math.tanh %63 : vector<8x32xf32>
    %65 = arith.mulf %59, %64 : vector<8x32xf32>
    %66 = vector.extract_strided_slice %9 {offsets = [24, 0], sizes = [8, 128], strides = [1, 1]} : vector<32x128xf32> to vector<8x128xf32>
    %cst_16 = arith.constant dense<0.000000e+00> : vector<8x128xf32>
    %67 = tpu.matmul %65, %1, %cst_16 {dimension_numbers = #tpu.dot_dimension_numbers<[1], [0], [0], [1], [0, 0, 1, 1], [], []>} : vector<8x32xf32>, vector<32x128xf32>, vector<8x128xf32> -> vector<8x128xf32>
    %68 = arith.addf %66, %67 : vector<8x128xf32>
    %69 = arith.negf %68 : vector<8x128xf32>
    %70 = math.exp %69 : vector<8x128xf32>
    %cst_17 = arith.constant 1.000000e+00 : f32
    %71 = vector.broadcast %cst_17 : f32 to vector<8x128xf32>
    %72 = arith.addf %71, %70 : vector<8x128xf32>
    %73 = arith.divf %71, %72 : vector<8x128xf32>
    %74 = math.tanh %68 : vector<8x128xf32>
    %75 = vector.extract_strided_slice %73 {offsets = [0, 0], sizes = [8, 32], strides = [1, 1]} : vector<8x128xf32> to vector<8x32xf32>
    %76 = vector.extract_strided_slice %73 {offsets = [0, 32], sizes = [8, 32], strides = [1, 1]} : vector<8x128xf32> to vector<8x32xf32>
    %77 = vector.extract_strided_slice %73 {offsets = [0, 96], sizes = [8, 32], strides = [1, 1]} : vector<8x128xf32> to vector<8x32xf32>
    %78 = vector.extract_strided_slice %74 {offsets = [0, 64], sizes = [8, 32], strides = [1, 1]} : vector<8x128xf32> to vector<8x32xf32>
    %79 = arith.mulf %76, %63 : vector<8x32xf32>
    %80 = arith.mulf %75, %78 : vector<8x32xf32>
    %81 = arith.addf %79, %80 : vector<8x32xf32>
    %82 = math.tanh %81 : vector<8x32xf32>
    %83 = arith.mulf %77, %82 : vector<8x32xf32>
    %c0_18 = arith.constant 0 : index
    %c0_19 = arith.constant 0 : index
    %84 = vector.load %arg1[%c0_18, %c0_19] : memref<8x1xf32, #tpu.memory_space<vmem>>, vector<8x1xf32>
    %85 = vector.broadcast %84 : vector<8x1xf32> to vector<8x128xf32>
    %86 = vector.broadcast %4 : vector<1x128xf32> to vector<8x128xf32>
    %87 = arith.mulf %85, %86 : vector<8x128xf32>
    %cst_20 = arith.constant dense<0.000000e+00> : vector<8x128xf32>
    %88 = tpu.matmul %83, %3, %cst_20 {dimension_numbers = #tpu.dot_dimension_numbers<[1], [0], [0], [1], [0, 0, 1, 1], [], []>} : vector<8x32xf32>, vector<32x128xf32>, vector<8x128xf32> -> vector<8x128xf32>
    %89 = arith.addf %87, %88 : vector<8x128xf32>
    %90 = vector.broadcast %5 : vector<1x128xf32> to vector<8x128xf32>
    %91 = arith.addf %89, %90 : vector<8x128xf32>
    %92 = arith.negf %91 : vector<8x128xf32>
    %93 = math.exp %92 : vector<8x128xf32>
    %cst_21 = arith.constant 1.000000e+00 : f32
    %94 = vector.broadcast %cst_21 : f32 to vector<8x128xf32>
    %95 = arith.addf %94, %93 : vector<8x128xf32>
    %96 = arith.divf %94, %95 : vector<8x128xf32>
    %97 = math.tanh %91 : vector<8x128xf32>
    %98 = vector.extract_strided_slice %96 {offsets = [0, 0], sizes = [8, 32], strides = [1, 1]} : vector<8x128xf32> to vector<8x32xf32>
    %99 = vector.extract_strided_slice %96 {offsets = [0, 32], sizes = [8, 32], strides = [1, 1]} : vector<8x128xf32> to vector<8x32xf32>
    %100 = vector.extract_strided_slice %96 {offsets = [0, 96], sizes = [8, 32], strides = [1, 1]} : vector<8x128xf32> to vector<8x32xf32>
    %101 = vector.extract_strided_slice %97 {offsets = [0, 64], sizes = [8, 32], strides = [1, 1]} : vector<8x128xf32> to vector<8x32xf32>
    %102 = arith.mulf %99, %81 : vector<8x32xf32>
    %103 = arith.mulf %98, %101 : vector<8x32xf32>
    %104 = arith.addf %102, %103 : vector<8x32xf32>
    %105 = math.tanh %104 : vector<8x32xf32>
    %106 = arith.mulf %100, %105 : vector<8x32xf32>
    %107 = arith.mulf %29, %106 : vector<8x32xf32>
    %cst_22 = arith.constant dense<0.000000e+00> : vector<8xf32>
    %108 = vector.multi_reduction <add>, %107, %cst_22 [1] : vector<8x32xf32> to vector<8xf32>
    %109 = vector.shape_cast %108 : vector<8xf32> to vector<8x1xf32>
    %110 = arith.mulf %47, %106 : vector<8x32xf32>
    %cst_23 = arith.constant dense<0.000000e+00> : vector<8xf32>
    %111 = vector.multi_reduction <add>, %110, %cst_23 [1] : vector<8x32xf32> to vector<8xf32>
    %112 = vector.shape_cast %111 : vector<8xf32> to vector<8x1xf32>
    %113 = arith.mulf %65, %106 : vector<8x32xf32>
    %cst_24 = arith.constant dense<0.000000e+00> : vector<8xf32>
    %114 = vector.multi_reduction <add>, %113, %cst_24 [1] : vector<8x32xf32> to vector<8xf32>
    %115 = vector.shape_cast %114 : vector<8xf32> to vector<8x1xf32>
    %116 = arith.mulf %83, %106 : vector<8x32xf32>
    %cst_25 = arith.constant dense<0.000000e+00> : vector<8xf32>
    %117 = vector.multi_reduction <add>, %116, %cst_25 [1] : vector<8x32xf32> to vector<8xf32>
    %118 = vector.shape_cast %117 : vector<8xf32> to vector<8x1xf32>
    %119 = arith.maximumf %109, %112 : vector<8x1xf32>
    %120 = arith.maximumf %119, %115 : vector<8x1xf32>
    %121 = arith.maximumf %120, %118 : vector<8x1xf32>
    %122 = arith.subf %109, %121 : vector<8x1xf32>
    %123 = math.exp %122 : vector<8x1xf32>
    %124 = arith.subf %112, %121 : vector<8x1xf32>
    %125 = math.exp %124 : vector<8x1xf32>
    %126 = arith.subf %115, %121 : vector<8x1xf32>
    %127 = math.exp %126 : vector<8x1xf32>
    %128 = arith.subf %118, %121 : vector<8x1xf32>
    %129 = math.exp %128 : vector<8x1xf32>
    %130 = arith.addf %123, %125 : vector<8x1xf32>
    %131 = arith.addf %130, %127 : vector<8x1xf32>
    %132 = arith.addf %131, %129 : vector<8x1xf32>
    %133 = tpu.reciprocal %132 {approx = true} : vector<8x1xf32> -> vector<8x1xf32>
    %cst_26 = arith.constant 0.000000e+00 : f32
    %134 = vector.broadcast %cst_26 : f32 to vector<8x32xf32>
    %135 = arith.mulf %123, %133 : vector<8x1xf32>
    %136 = vector.broadcast %135 : vector<8x1xf32> to vector<8x32xf32>
    %137 = arith.mulf %136, %29 : vector<8x32xf32>
    %138 = arith.addf %134, %137 : vector<8x32xf32>
    %139 = arith.mulf %125, %133 : vector<8x1xf32>
    %140 = vector.broadcast %139 : vector<8x1xf32> to vector<8x32xf32>
    %141 = arith.mulf %140, %47 : vector<8x32xf32>
    %142 = arith.addf %138, %141 : vector<8x32xf32>
    %143 = arith.mulf %127, %133 : vector<8x1xf32>
    %144 = vector.broadcast %143 : vector<8x1xf32> to vector<8x32xf32>
    %145 = arith.mulf %144, %65 : vector<8x32xf32>
    %146 = arith.addf %142, %145 : vector<8x32xf32>
    %147 = arith.mulf %129, %133 : vector<8x1xf32>
    %148 = vector.broadcast %147 : vector<8x1xf32> to vector<8x32xf32>
    %149 = arith.mulf %148, %83 : vector<8x32xf32>
    %150 = arith.addf %146, %149 : vector<8x32xf32>
    %c0_27 = arith.constant 0 : index
    %c0_28 = arith.constant 0 : index
    %151 = vector.load %arg3[%c0_27, %c0_28] : memref<88x32xf32, #tpu.memory_space<vmem>>, vector<32x32xf32>
    %c32 = arith.constant 32 : index
    %c0_29 = arith.constant 0 : index
    %152 = vector.load %arg3[%c32, %c0_29] : memref<88x32xf32, #tpu.memory_space<vmem>>, vector<32x32xf32>
    %c64 = arith.constant 64 : index
    %c0_30 = arith.constant 0 : index
    %153 = vector.load %arg3[%c64, %c0_30] : memref<88x32xf32, #tpu.memory_space<vmem>>, vector<1x32xf32>
    %c72 = arith.constant 72 : index
    %c0_31 = arith.constant 0 : index
    %154 = vector.load %arg3[%c72, %c0_31] : memref<88x32xf32, #tpu.memory_space<vmem>>, vector<1x32xf32>
    %c80 = arith.constant 80 : index
    %c0_32 = arith.constant 0 : index
    %155 = vector.load %arg3[%c80, %c0_32] : memref<88x32xf32, #tpu.memory_space<vmem>>, vector<1x32xf32>
    %156 = vector.extract_strided_slice %155 {offsets = [0, 0], sizes = [1, 1], strides = [1, 1]} : vector<1x32xf32> to vector<1x1xf32>
    %cst_33 = arith.constant dense<0.000000e+00> : vector<8x32xf32>
    %157 = tpu.matmul %150, %151, %cst_33 {dimension_numbers = #tpu.dot_dimension_numbers<[1], [0], [0], [1], [0, 0, 1, 1], [], []>} : vector<8x32xf32>, vector<32x32xf32>, vector<8x32xf32> -> vector<8x32xf32>
    %cst_34 = arith.constant dense<0.000000e+00> : vector<8x32xf32>
    %158 = tpu.matmul %106, %152, %cst_34 {dimension_numbers = #tpu.dot_dimension_numbers<[1], [0], [0], [1], [0, 0, 1, 1], [], []>} : vector<8x32xf32>, vector<32x32xf32>, vector<8x32xf32> -> vector<8x32xf32>
    %159 = arith.addf %157, %158 : vector<8x32xf32>
    %160 = vector.broadcast %153 : vector<1x32xf32> to vector<8x32xf32>
    %161 = arith.addf %159, %160 : vector<8x32xf32>
    %162 = math.tanh %161 : vector<8x32xf32>
    %163 = vector.broadcast %154 : vector<1x32xf32> to vector<8x32xf32>
    %164 = arith.mulf %162, %163 : vector<8x32xf32>
    %cst_35 = arith.constant dense<0.000000e+00> : vector<8xf32>
    %165 = vector.multi_reduction <add>, %164, %cst_35 [1] : vector<8x32xf32> to vector<8xf32>
    %166 = vector.shape_cast %165 : vector<8xf32> to vector<8x1xf32>
    %167 = vector.broadcast %156 : vector<1x1xf32> to vector<8x1xf32>
    %168 = arith.addf %166, %167 : vector<8x1xf32>
    %cst_36 = arith.constant dense<0xFF800000> : vector<8xf32>
    %169 = vector.multi_reduction <maximumf>, %168, %cst_36 [1] : vector<8x1xf32> to vector<8xf32>
    %170 = vector.shape_cast %169 : vector<8xf32> to vector<8x1xf32>
    %171 = arith.subf %168, %170 : vector<8x1xf32>
    %172 = math.exp %171 : vector<8x1xf32>
    %cst_37 = arith.constant dense<0.000000e+00> : vector<8xf32>
    %173 = vector.multi_reduction <add>, %172, %cst_37 [1] : vector<8x1xf32> to vector<8xf32>
    %174 = vector.shape_cast %173 : vector<8xf32> to vector<8x1xf32>
    %175 = math.log %174 : vector<8x1xf32>
    %176 = arith.addf %170, %175 : vector<8x1xf32>
    %177 = arith.subf %168, %176 : vector<8x1xf32>
    %c0_38 = arith.constant 0 : index
    %c0_39 = arith.constant 0 : index
    %178 = vector.load %arg4[%c0_38, %c0_39] : memref<8x1xf32, #tpu.memory_space<vmem>>, vector<8x1xf32>
    tpu.vector_store %arg4[%c0_38, %c0_39], %177 {strides = array<i32>} : memref<8x1xf32, #tpu.memory_space<vmem>>, vector<8x1xf32>,
    return
  }
}

</mosaic_0001>

<llo_original>
// kernel: tpu_custom_call.1
$region0: #{tpu_custom_call.1}
  #allocation0 [shape = 'u32[]', space=smem, size = 0x4, offset = 0x4, fixed_abs, tag = 'smem constant byte address 0x4 - core index']
  #allocation1 [shape = 'u32[144,128]{1,0:T(1,128)}', space=vmem, size = 0x12000, scoped, tag = 'internal scratch']
  %s0 = inlined_call_operand.vmem [shape: f32[32,128], index: 0, kind: input, shape index: {}]
  %s1 = inlined_call_operand.vmem [shape: f32[8,1], index: 1, kind: input, shape index: {}]
  %s2 = inlined_call_operand.hbm [shape: f32[216,128], index: 2, kind: input, shape index: {}]
  %s3 = inlined_call_operand.vmem [shape: f32[88,32], index: 3, kind: input, shape index: {}]
  %s4 = inlined_call_operand.vmem [shape: f32[8,1], index: 4, kind: output, shape index: {}]
  %s5 = sld [smem:[#allocation0]]
  $region30: #{tpu_custom_call.1} parent=0
    _
  %s7 = ssub.s32 1, %s5
  %s8 = scalar_select 0, %s7, %s5
  $region1: #{tpu_custom_call.1} parent=0
    #allocation2 [shape = 'u8[110592]{0}', space=vmem, size = 0x1b000, scoped, tag = 'input window, operand 2, single buffered']
    #allocation3 [shape = 's32[1]{0}', space=sflag, size = 0x4, scoped, tag = 'scoped memory for tpu_custom_call.1']
    %9 = vsyncpa [#allocation3], 0
    // Predicated region
    $region2: #{tpu_custom_call.1} parent=1 // pred_check
      _
    $region3: #{tpu_custom_call.1} parent=1 // pred_check_branch
      %11 = sbr.rel (0) target = $region5
    $region4: #{tpu_custom_call.1} parent=1 // pred_region
      _
    $region5: #{tpu_custom_call.1} parent=1 // pred_fallthru
      _
    // Predicated region
    $region6: #{tpu_custom_call.1} parent=1 // pred_check
      _
    $region7: #{tpu_custom_call.1} parent=1 // pred_check_branch
      %13 = sbr.rel (0) target = $region9
    $region8: #{tpu_custom_call.1} parent=1 // pred_region
      _
    $region9: #{tpu_custom_call.1} parent=1 // pred_fallthru
      _
    // Predicated region
    $region10: #{tpu_custom_call.1} parent=1 // pred_check
      _
    $region11: #{tpu_custom_call.1} parent=1 // pred_check_branch
      %15 = sbr.rel (0) target = $region13
    $region12: #{tpu_custom_call.1} parent=1 // pred_region
      %s17 = ssub.s32 3456, 3456
      %18 = vsyncadd [#allocation3], %s17
      %s19 = sshll.u32 [#allocation2], 4
      %s20 = int_to_ptr.vmem [resolvable:$true] %s19
      %25 = dma.hbm_to_vmem [thread:$0]  %s2, 3456, %s20, [#allocation3], 128, 128, 8
    $region13: #{tpu_custom_call.1} parent=1 // pred_fallthru
      _
    // Predicated region
    $region14: #{tpu_custom_call.1} parent=1 // pred_check
      _
    $region15: #{tpu_custom_call.1} parent=1 // pred_check_branch
      %27 = sbr.rel (0) target = $region17
    $region16: #{tpu_custom_call.1} parent=1 // pred_region
      _
    $region17: #{tpu_custom_call.1} parent=1 // pred_fallthru
      _
    // Predicated region
    $region18: #{tpu_custom_call.1} parent=1 // pred_check
      _
    $region19: #{tpu_custom_call.1} parent=1 // pred_check_branch
      %29 = sbr.rel (0) target = $region21
    $region20: #{tpu_custom_call.1} parent=1 // pred_region
      %30 = dma.done [#allocation3], 3456
    $region21: #{tpu_custom_call.1} parent=1 // pred_fallthru
      _
    %v31 = vld [vmem:[#allocation2] sm:$0xff]
    %v32 = vld [vmem:[#allocation2 + $0x8] sm:$0xff]
    %v33 = vld [vmem:[#allocation2 + $0x10] sm:$0xff]
    %v34 = vld [vmem:[#allocation2 + $0x18] sm:$0xff]
    %v35 = vld [vmem:[#allocation2 + $0x20] sm:$0xff]
    %v36 = vld [vmem:[#allocation2 + $0x28] sm:$0xff]
    %v37 = vld [vmem:[#allocation2 + $0x30] sm:$0xff]
    %v38 = vld [vmem:[#allocation2 + $0x38] sm:$0xff]
    %v39 = vld [vmem:[#allocation2 + $0x40] sm:$0xff]
    %v40 = vld [vmem:[#allocation2 + $0x48] sm:$0xff]
    %v41 = vld [vmem:[#allocation2 + $0x50] sm:$0xff]
    %v42 = vld [vmem:[#allocation2 + $0x58] sm:$0xff]
    %v43 = vld [vmem:[#allocation2 + $0x60] sm:$0xff]
    %v44 = vld [vmem:[#allocation2 + $0x68] sm:$0xff]
    %v45 = vld [vmem:[#allocation2 + $0x70] sm:$0xff]
    %v46 = vld [vmem:[#allocation2 + $0x78] sm:$0xff]
    %v47 = vld [vmem:[#allocation2 + $0x80] sm:$0xff]
    %v48 = vld [vmem:[#allocation2 + $0x88] sm:$0xff]
    %v49 = vld [vmem:[#allocation2 + $0x90] sm:$0xff]
    %v50 = vld [vmem:[#allocation2 + $0x98] sm:$0xff]
    %v51 = vld [vmem:[#allocation2 + $0xa0] sm:$0x1]
    %v52 = vld [vmem:[#allocation2 + $0xa8] sm:$0xff]
    %v53 = vld [vmem:[#allocation2 + $0xb0] sm:$0xff]
    %v54 = vld [vmem:[#allocation2 + $0xb8] sm:$0xff]
    %v55 = vld [vmem:[#allocation2 + $0xc0] sm:$0xff]
    %v56 = vld [vmem:[#allocation2 + $0xc8] sm:$0x1]
    %v57 = vld [vmem:[#allocation2 + $0xd0] sm:$0x1]
    %v58 = vld [vmem:[%s0] sm:$0xff]
    %v59 = vld [vmem:[%s0 + $0x8] sm:$0xff]
    %v60 = vld [vmem:[%s0 + $0x10] sm:$0xff]
    %v61 = vld [vmem:[%s0 + $0x18] sm:$0xff]
    %v62 = vlaneseq
    %v63 = vshrl.u32 %v62, 7
    %v64 = vsub.s32 0, %v63
    %v65 = vrot.slane %v51, %v64
    %66 = vmatprep.subr.mxu0 0.0
    %67 = vmatpush1.msra.mxu0 %v31
    %68 = vmatprep.subr.mxu0 0.0
    %69 = vmatpush1.msra.mxu0 %v32
    %70 = vmatprep.subr.mxu0 0.0
    %71 = vmatpush1.msra.mxu0 %v33
    %72 = vmatprep.subr.mxu0 0.0
    %73 = vmatpush1.msra.mxu0 %v34
    %74 = vmatprep.subr.mxu0 0.0
    %75 = vmatpush1.msra.mxu0 %v35
    %76 = vmatprep.subr.mxu0 0.0
    %77 = vmatpush1.msra.mxu0 %v36
    %78 = vmatprep.subr.mxu0 0.0
    %79 = vmatpush1.msra.mxu0 %v37
    %80 = vmatprep.subr.mxu0 0.0
    %81 = vmatpush1.msra.mxu0 %v38
    %82 = vmatprep.subr.mxu0 0.0
    %83 = vmatpush1.msra.mxu0 %v39
    %84 = vmatprep.subr.mxu0 0.0
    %85 = vmatpush1.msra.mxu0 %v40
    %86 = vmatprep.subr.mxu0 0.0
    %87 = vmatpush1.msra.mxu0 %v41
    %88 = vmatprep.subr.mxu0 0.0
    %89 = vmatpush1.msra.mxu0 %v42
    %90 = vmatprep.subr.mxu0 0.0
    %91 = vmatpush1.msra.mxu0 %v43
    %92 = vmatprep.subr.mxu0 0.0
    %93 = vmatpush1.msra.mxu0 %v44
    %94 = vmatprep.subr.mxu0 0.0
    %95 = vmatpush1.msra.mxu0 %v45
    %96 = vmatprep.subr.mxu0 0.0
    %97 = vmatpush1.msra.mxu0 %v46
    %98 = vmatprep.subr.mxu0 0.0
    %99 = vmatpush1.msra.mxu0 0.0
    %100 = vmatprep.subr.mxu0 0.0
    %101 = vmatpush1.msra.mxu0 0.0
    %102 = vmatprep.subr.mxu0 0.0
    %103 = vmatpush1.msra.mxu0 0.0
    %104 = vmatprep.subr.mxu0 0.0
    %105 = vmatpush1.msra.mxu0 0.0
    %106 = vmatprep.subr.mxu0 0.0
    %107 = vmatpush1.msra.mxu0 0.0
    %108 = vmatprep.subr.mxu0 0.0
    %109 = vmatpush1.msra.mxu0 0.0
    %110 = vmatprep.subr.mxu0 0.0
    %111 = vmatpush1.msra.mxu0 0.0
    %112 = vmatprep.subr.mxu0 0.0
    %113 = vmatpush1.msra.mxu0 0.0
    %114 = vmatprep.subr.mxu0 0.0
    %115 = vmatpush1.msra.mxu0 0.0
    %116 = vmatprep.subr.mxu0 0.0
    %117 = vmatpush1.msra.mxu0 0.0
    %118 = vmatprep.subr.mxu0 0.0
    %119 = vmatpush1.msra.mxu0 0.0
    %120 = vmatprep.subr.mxu0 0.0
    %121 = vmatpush1.msra.mxu0 0.0
    %122 = vmatprep.subr.mxu0 0.0
    %123 = vmatpush1.msra.mxu0 0.0
    %124 = vmatprep.subr.mxu0 0.0
    %125 = vmatpush1.msra.mxu0 0.0
    %126 = vmatprep.subr.mxu0 0.0
    %127 = vmatpush1.msra.mxu0 0.0
    %128 = vmatprep.subr.mxu0 0.0
    %129 = vmatpush1.msra.mxu0 0.0
    %130 = vmatprep.mubr.f32.mxu0 0.0
    %131 = vmatmul.mubr.f32.gmra.mrb[0].mxu0 %v58
    %v132 = vpop.f32.mrb[0].mxu0
    %v133 = vadd.f32 %v65, %v132
    %v134 = vpop.f32.mrb[0].mxu0
    %135 = vmatprep.mubr.f32.mxu0 0.0
    %136 = vmatmul.mubr.f32.gmra.mrb[0].mxu0 %v59
    %v137 = vpop.f32.mrb[0].mxu0
    %v138 = vadd.f32 %v65, %v137
    %v139 = vpop.f32.mrb[0].mxu0
    %140 = vmatprep.mubr.f32.mxu0 0.0
    %141 = vmatmul.mubr.f32.gmra.mrb[0].mxu0 %v60
    %v142 = vpop.f32.mrb[0].mxu0
    %v143 = vadd.f32 %v65, %v142
    %v144 = vpop.f32.mrb[0].mxu0
    %145 = vmatprep.mubr.f32.mxu0 0.0
    %146 = vmatmul.mubr.f32.gmra.mrb[0].mxu0 %v61
    %v147 = vpop.f32.mrb[0].mxu0
    %v148 = vadd.f32 %v65, %v147
    %v149 = vpop.f32.mrb[0].mxu0
    %150 = vdwg.mxu0
    %vm151 = vcmask 261120
    %v153 = vsel %vm151, 0.0, 0
    %155 = vmatprep.subr.mxu0 0.0
    %156 = vmatpush1.msra.mxu0 %v47
    %157 = vmatprep.subr.mxu0 0.0
    %158 = vmatpush1.msra.mxu0 %v48
    %159 = vmatprep.subr.mxu0 0.0
    %160 = vmatpush1.msra.mxu0 %v49
    %161 = vmatprep.subr.mxu0 0.0
    %162 = vmatpush1.msra.mxu0 %v50
    %163 = vmatprep.subr.mxu0 0.0
    %164 = vmatpush1.msra.mxu0 0.0
    %165 = vmatprep.subr.mxu0 0.0
    %166 = vmatpush1.msra.mxu0 0.0
    %167 = vmatprep.subr.mxu0 0.0
    %168 = vmatpush1.msra.mxu0 0.0
    %169 = vmatprep.subr.mxu0 0.0
    %170 = vmatpush1.msra.mxu0 0.0
    %171 = vmatprep.subr.mxu0 0.0
    %172 = vmatpush1.msra.mxu0 0.0
    %173 = vmatprep.subr.mxu0 0.0
    %174 = vmatpush1.msra.mxu0 0.0
    %175 = vmatprep.subr.mxu0 0.0
    %176 = vmatpush1.msra.mxu0 0.0
    %177 = vmatprep.subr.mxu0 0.0
    %178 = vmatpush1.msra.mxu0 0.0
    %179 = vmatprep.subr.mxu0 0.0
    %180 = vmatpush1.msra.mxu0 0.0
    %181 = vmatprep.subr.mxu0 0.0
    %182 = vmatpush1.msra.mxu0 0.0
    %183 = vmatprep.subr.mxu0 0.0
    %184 = vmatpush1.msra.mxu0 0.0
    %185 = vmatprep.subr.mxu0 0.0
    %186 = vmatpush1.msra.mxu0 0.0
    %187 = vmatprep.subr.mxu0 0.0
    %188 = vmatpush1.msra.mxu0 0.0
    %189 = vmatprep.subr.mxu0 0.0
    %190 = vmatpush1.msra.mxu0 0.0
    %191 = vmatprep.subr.mxu0 0.0
    %192 = vmatpush1.msra.mxu0 0.0
    %193 = vmatprep.subr.mxu0 0.0
    %194 = vmatpush1.msra.mxu0 0.0
    %195 = vmatprep.subr.mxu0 0.0
    %196 = vmatpush1.msra.mxu0 0.0
    %197 = vmatprep.subr.mxu0 0.0
    %198 = vmatpush1.msra.mxu0 0.0
    %199 = vmatprep.subr.mxu0 0.0
    %200 = vmatpush1.msra.mxu0 0.0
    %201 = vmatprep.subr.mxu0 0.0
    %202 = vmatpush1.msra.mxu0 0.0
    %203 = vmatprep.subr.mxu0 0.0
    %204 = vmatpush1.msra.mxu0 0.0
    %205 = vmatprep.subr.mxu0 0.0
    %206 = vmatpush1.msra.mxu0 0.0
    %207 = vmatprep.subr.mxu0 0.0
    %208 = vmatpush1.msra.mxu0 0.0
    %209 = vmatprep.subr.mxu0 0.0
    %210 = vmatpush1.msra.mxu0 0.0
    %211 = vmatprep.subr.mxu0 0.0
    %212 = vmatpush1.msra.mxu0 0.0
    %213 = vmatprep.subr.mxu0 0.0
    %214 = vmatpush1.msra.mxu0 0.0
    %215 = vmatprep.subr.mxu0 0.0
    %216 = vmatpush1.msra.mxu0 0.0
    %217 = vmatprep.subr.mxu0 0.0
    %218 = vmatpush1.msra.mxu0 0.0
    %219 = vmatprep.mubr.f32.mxu0 0.0
    %220 = vmatmul.mubr.f32.gmra.mrb[0].mxu0 %v153
    %v221 = vpop.f32.mrb[0].mxu0
    %v222 = vadd.f32 0.0, %v221
    %v223 = vpop.f32.mrb[0].mxu0
    %224 = vdwg.mxu0
    %v225 = vadd.f32 %v133, %v222
    %v226 = vxor.u32 %v225, 2147483648
    %v227 = vmul.f32 %v226, 1.442695
    %v228 = vpow.pop %v227
    %v229 = vadd.f32 %v228, 1.0
    %v230 = vrcp.pop %v229
    %v231 = vmul.f32 1.0, %v230
    %v232 = vtanh.pop %v225
    %v233 = vmul.f32 %v231, 0.0
    %235 = vrot.lane.b32.xlu0 %v232, 64
    %v236 = vpop.permute.xlu0 %235
    %v238 = vmul.f32 %v231, %v236
    %240 = vrot.lane.b32.xlu0 %v238, 32
    %v241 = vpop.permute.xlu0 %240
    %v243 = vadd.f32 %v233, %v241
    %v244 = vtanh.pop %v243
    %246 = vrot.lane.b32.xlu0 %v244, 64
    %v247 = vpop.permute.xlu0 %246
    %v249 = vmul.f32 %v231, %v247
    %251 = vrot.lane.b32.xlu0 %v249, 32
    %v252 = vpop.permute.xlu0 %251
    %v253 = vsel %vm151, %v252, 0
    %255 = vmatprep.subr.mxu0 0.0
    %256 = vmatpush1.msra.mxu0 %v47
    %257 = vmatprep.subr.mxu0 0.0
    %258 = vmatpush1.msra.mxu0 %v48
    %259 = vmatprep.subr.mxu0 0.0
    %260 = vmatpush1.msra.mxu0 %v49
    %261 = vmatprep.subr.mxu0 0.0
    %262 = vmatpush1.msra.mxu0 %v50
    %263 = vmatprep.subr.mxu0 0.0
    %264 = vmatpush1.msra.mxu0 0.0
    %265 = vmatprep.subr.mxu0 0.0
    %266 = vmatpush1.msra.mxu0 0.0
    %267 = vmatprep.subr.mxu0 0.0
    %268 = vmatpush1.msra.mxu0 0.0
    %269 = vmatprep.subr.mxu0 0.0
    %270 = vmatpush1.msra.mxu0 0.0
    %271 = vmatprep.subr.mxu0 0.0
    %272 = vmatpush1.msra.mxu0 0.0
    %273 = vmatprep.subr.mxu0 0.0
    %274 = vmatpush1.msra.mxu0 0.0
    %275 = vmatprep.subr.mxu0 0.0
    %276 = vmatpush1.msra.mxu0 0.0
    %277 = vmatprep.subr.mxu0 0.0
    %278 = vmatpush1.msra.mxu0 0.0
    %279 = vmatprep.subr.mxu0 0.0
    %280 = vmatpush1.msra.mxu0 0.0
    %281 = vmatprep.subr.mxu0 0.0
    %282 = vmatpush1.msra.mxu0 0.0
    %283 = vmatprep.subr.mxu0 0.0
    %284 = vmatpush1.msra.mxu0 0.0
    %285 = vmatprep.subr.mxu0 0.0
    %286 = vmatpush1.msra.mxu0 0.0
    %287 = vmatprep.subr.mxu0 0.0
    %288 = vmatpush1.msra.mxu0 0.0
    %289 = vmatprep.subr.mxu0 0.0
    %290 = vmatpush1.msra.mxu0 0.0
    %291 = vmatprep.subr.mxu0 0.0
    %292 = vmatpush1.msra.mxu0 0.0
    %293 = vmatprep.subr.mxu0 0.0
    %294 = vmatpush1.msra.mxu0 0.0
    %295 = vmatprep.subr.mxu0 0.0
    %296 = vmatpush1.msra.mxu0 0.0
    %297 = vmatprep.subr.mxu0 0.0
    %298 = vmatpush1.msra.mxu0 0.0
    %299 = vmatprep.subr.mxu0 0.0
    %300 = vmatpush1.msra.mxu0 0.0
    %301 = vmatprep.subr.mxu0 0.0
    %302 = vmatpush1.msra.mxu0 0.0
    %303 = vmatprep.subr.mxu0 0.0
    %304 = vmatpush1.msra.mxu0 0.0
    %305 = vmatprep.subr.mxu0 0.0
    %306 = vmatpush1.msra.mxu0 0.0
    %307 = vmatprep.subr.mxu0 0.0
    %308 = vmatpush1.msra.mxu0 0.0
    %309 = vmatprep.subr.mxu0 0.0
    %310 = vmatpush1.msra.mxu0 0.0
    %311 = vmatprep.subr.mxu0 0.0
    %312 = vmatpush1.msra.mxu0 0.0
    %313 = vmatprep.subr.mxu0 0.0
    %314 = vmatpush1.msra.mxu0 0.0
    %315 = vmatprep.subr.mxu0 0.0
    %316 = vmatpush1.msra.mxu0 0.0
    %317 = vmatprep.subr.mxu0 0.0
    %318 = vmatpush1.msra.mxu0 0.0
    %319 = vmatprep.mubr.f32.mxu0 0.0
    %320 = vmatmul.mubr.f32.gmra.mrb[0].mxu0 %v253
    %v321 = vpop.f32.mrb[0].mxu0
    %v322 = vadd.f32 0.0, %v321
    %v323 = vpop.f32.mrb[0].mxu0
    %324 = vdwg.mxu0
    %v325 = vadd.f32 %v138, %v322
    %v326 = vxor.u32 %v325, 2147483648
    %v327 = vmul.f32 %v326, 1.442695
    %v328 = vpow.pop %v327
    %v329 = vadd.f32 %v328, 1.0
    %v330 = vrcp.pop %v329
    %v331 = vmul.f32 1.0, %v330
    %v332 = vtanh.pop %v325
    %v333 = vmul.f32 %v331, %v243
    %335 = vrot.lane.b32.xlu0 %v332, 64
    %v336 = vpop.permute.xlu0 %335
    %v338 = vmul.f32 %v331, %v336
    %340 = vrot.lane.b32.xlu0 %v338, 32
    %v341 = vpop.permute.xlu0 %340
    %v343 = vadd.f32 %v333, %v341
    %v344 = vtanh.pop %v343
    %346 = vrot.lane.b32.xlu0 %v344, 64
    %v347 = vpop.permute.xlu0 %346
    %v349 = vmul.f32 %v331, %v347
    %351 = vrot.lane.b32.xlu0 %v349, 32
    %v352 = vpop.permute.xlu0 %351
    %v353 = vsel %vm151, %v352, 0
    %355 = vmatprep.subr.mxu0 0.0
    %356 = vmatpush1.msra.mxu0 %v47
    %357 = vmatprep.subr.mxu0 0.0
    %358 = vmatpush1.msra.mxu0 %v48
    %359 = vmatprep.subr.mxu0 0.0
    %360 = vmatpush1.msra.mxu0 %v49
    %361 = vmatprep.subr.mxu0 0.0
    %362 = vmatpush1.msra.mxu0 %v50
    %363 = vmatprep.subr.mxu0 0.0
    %364 = vmatpush1.msra.mxu0 0.0
    %365 = vmatprep.subr.mxu0 0.0
    %366 = vmatpush1.msra.mxu0 0.0
    %367 = vmatprep.subr.mxu0 0.0
    %368 = vmatpush1.msra.mxu0 0.0
    %369 = vmatprep.subr.mxu0 0.0
    %370 = vmatpush1.msra.mxu0 0.0
    %371 = vmatprep.subr.mxu0 0.0
    %372 = vmatpush1.msra.mxu0 0.0
    %373 = vmatprep.subr.mxu0 0.0
    %374 = vmatpush1.msra.mxu0 0.0
    %375 = vmatprep.subr.mxu0 0.0
    %376 = vmatpush1.msra.mxu0 0.0
    %377 = vmatprep.subr.mxu0 0.0
    %378 = vmatpush1.msra.mxu0 0.0
    %379 = vmatprep.subr.mxu0 0.0
    %380 = vmatpush1.msra.mxu0 0.0
    %381 = vmatprep.subr.mxu0 0.0
    %382 = vmatpush1.msra.mxu0 0.0
    %383 = vmatprep.subr.mxu0 0.0
    %384 = vmatpush1.msra.mxu0 0.0
    %385 = vmatprep.subr.mxu0 0.0
    %386 = vmatpush1.msra.mxu0 0.0
    %387 = vmatprep.subr.mxu0 0.0
    %388 = vmatpush1.msra.mxu0 0.0
    %389 = vmatprep.subr.mxu0 0.0
    %390 = vmatpush1.msra.mxu0 0.0
    %391 = vmatprep.subr.mxu0 0.0
    %392 = vmatpush1.msra.mxu0 0.0
    %393 = vmatprep.subr.mxu0 0.0
    %394 = vmatpush1.msra.mxu0 0.0
    %395 = vmatprep.subr.mxu0 0.0
    %396 = vmatpush1.msra.mxu0 0.0
    %397 = vmatprep.subr.mxu0 0.0
    %398 = vmatpush1.msra.mxu0 0.0
    %399 = vmatprep.subr.mxu0 0.0
    %400 = vmatpush1.msra.mxu0 0.0
    %401 = vmatprep.subr.mxu0 0.0
    %402 = vmatpush1.msra.mxu0 0.0
    %403 = vmatprep.subr.mxu0 0.0
    %404 = vmatpush1.msra.mxu0 0.0
    %405 = vmatprep.subr.mxu0 0.0
    %406 = vmatpush1.msra.mxu0 0.0
    %407 = vmatprep.subr.mxu0 0.0
    %408 = vmatpush1.msra.mxu0 0.0
    %409 = vmatprep.subr.mxu0 0.0
    %410 = vmatpush1.msra.mxu0 0.0
    %411 = vmatprep.subr.mxu0 0.0
    %412 = vmatpush1.msra.mxu0 0.0
    %413 = vmatprep.subr.mxu0 0.0
    %414 = vmatpush1.msra.mxu0 0.0
    %415 = vmatprep.subr.mxu0 0.0
    %416 = vmatpush1.msra.mxu0 0.0
    %417 = vmatprep.subr.mxu0 0.0
    %418 = vmatpush1.msra.mxu0 0.0
    %419 = vmatprep.mubr.f32.mxu0 0.0
    %420 = vmatmul.mubr.f32.gmra.mrb[0].mxu0 %v353
    %v421 = vpop.f32.mrb[0].mxu0
    %v422 = vadd.f32 0.0, %v421
    %v423 = vpop.f32.mrb[0].mxu0
    %424 = vdwg.mxu0
    %v425 = vadd.f32 %v143, %v422
    %v426 = vxor.u32 %v425, 2147483648
    %v427 = vmul.f32 %v426, 1.442695
    %v428 = vpow.pop %v427
    %v429 = vadd.f32 %v428, 1.0
    %v430 = vrcp.pop %v429
    %v431 = vmul.f32 1.0, %v430
    %v432 = vtanh.pop %v425
    %v433 = vmul.f32 %v431, %v343
    %435 = vrot.lane.b32.xlu0 %v432, 64
    %v436 = vpop.permute.xlu0 %435
    %v438 = vmul.f32 %v431, %v436
    %440 = vrot.lane.b32.xlu0 %v438, 32
    %v441 = vpop.permute.xlu0 %440
    %v443 = vadd.f32 %v433, %v441
    %v444 = vtanh.pop %v443
    %446 = vrot.lane.b32.xlu0 %v444, 64
    %v447 = vpop.permute.xlu0 %446
    %v449 = vmul.f32 %v431, %v447
    %451 = vrot.lane.b32.xlu0 %v449, 32
    %v452 = vpop.permute.xlu0 %451
    %v453 = vsel %vm151, %v452, 0
    %455 = vmatprep.subr.mxu0 0.0
    %456 = vmatpush1.msra.mxu0 %v47
    %457 = vmatprep.subr.mxu0 0.0
    %458 = vmatpush1.msra.mxu0 %v48
    %459 = vmatprep.subr.mxu0 0.0
    %460 = vmatpush1.msra.mxu0 %v49
    %461 = vmatprep.subr.mxu0 0.0
    %462 = vmatpush1.msra.mxu0 %v50
    %463 = vmatprep.subr.mxu0 0.0
    %464 = vmatpush1.msra.mxu0 0.0
    %465 = vmatprep.subr.mxu0 0.0
    %466 = vmatpush1.msra.mxu0 0.0
    %467 = vmatprep.subr.mxu0 0.0
    %468 = vmatpush1.msra.mxu0 0.0
    %469 = vmatprep.subr.mxu0 0.0
    %470 = vmatpush1.msra.mxu0 0.0
    %471 = vmatprep.subr.mxu0 0.0
    %472 = vmatpush1.msra.mxu0 0.0
    %473 = vmatprep.subr.mxu0 0.0
    %474 = vmatpush1.msra.mxu0 0.0
    %475 = vmatprep.subr.mxu0 0.0
    %476 = vmatpush1.msra.mxu0 0.0
    %477 = vmatprep.subr.mxu0 0.0
    %478 = vmatpush1.msra.mxu0 0.0
    %479 = vmatprep.subr.mxu0 0.0
    %480 = vmatpush1.msra.mxu0 0.0
    %481 = vmatprep.subr.mxu0 0.0
    %482 = vmatpush1.msra.mxu0 0.0
    %483 = vmatprep.subr.mxu0 0.0
    %484 = vmatpush1.msra.mxu0 0.0
    %485 = vmatprep.subr.mxu0 0.0
    %486 = vmatpush1.msra.mxu0 0.0
    %487 = vmatprep.subr.mxu0 0.0
    %488 = vmatpush1.msra.mxu0 0.0
    %489 = vmatprep.subr.mxu0 0.0
    %490 = vmatpush1.msra.mxu0 0.0
    %491 = vmatprep.subr.mxu0 0.0
    %492 = vmatpush1.msra.mxu0 0.0
    %493 = vmatprep.subr.mxu0 0.0
    %494 = vmatpush1.msra.mxu0 0.0
    %495 = vmatprep.subr.mxu0 0.0
    %496 = vmatpush1.msra.mxu0 0.0
    %497 = vmatprep.subr.mxu0 0.0
    %498 = vmatpush1.msra.mxu0 0.0
    %499 = vmatprep.subr.mxu0 0.0
    %500 = vmatpush1.msra.mxu0 0.0
    %501 = vmatprep.subr.mxu0 0.0
    %502 = vmatpush1.msra.mxu0 0.0
    %503 = vmatprep.subr.mxu0 0.0
    %504 = vmatpush1.msra.mxu0 0.0
    %505 = vmatprep.subr.mxu0 0.0
    %506 = vmatpush1.msra.mxu0 0.0
    %507 = vmatprep.subr.mxu0 0.0
    %508 = vmatpush1.msra.mxu0 0.0
    %509 = vmatprep.subr.mxu0 0.0
    %510 = vmatpush1.msra.mxu0 0.0
    %511 = vmatprep.subr.mxu0 0.0
    %512 = vmatpush1.msra.mxu0 0.0
    %513 = vmatprep.subr.mxu0 0.0
    %514 = vmatpush1.msra.mxu0 0.0
    %515 = vmatprep.subr.mxu0 0.0
    %516 = vmatpush1.msra.mxu0 0.0
    %517 = vmatprep.subr.mxu0 0.0
    %518 = vmatpush1.msra.mxu0 0.0
    %519 = vmatprep.mubr.f32.mxu0 0.0
    %520 = vmatmul.mubr.f32.gmra.mrb[0].mxu0 %v453
    %v521 = vpop.f32.mrb[0].mxu0
    %v522 = vadd.f32 0.0, %v521
    %v523 = vpop.f32.mrb[0].mxu0
    %524 = vdwg.mxu0
    %v525 = vadd.f32 %v148, %v522
    %v526 = vxor.u32 %v525, 2147483648
    %v527 = vmul.f32 %v526, 1.442695
    %v528 = vpow.pop %v527
    %v529 = vadd.f32 %v528, 1.0
    %v530 = vrcp.pop %v529
    %v531 = vmul.f32 1.0, %v530
    %v532 = vtanh.pop %v525
    %v533 = vmul.f32 %v531, %v443
    %535 = vrot.lane.b32.xlu0 %v532, 64
    %v536 = vpop.permute.xlu0 %535
    %v538 = vmul.f32 %v531, %v536
    %540 = vrot.lane.b32.xlu0 %v538, 32
    %v541 = vpop.permute.xlu0 %540
    %v543 = vadd.f32 %v533, %v541
    %v544 = vtanh.pop %v543
    %546 = vrot.lane.b32.xlu0 %v544, 64
    %v547 = vpop.permute.xlu0 %546
    %v549 = vmul.f32 %v531, %v547
    %v550 = vld [vmem:[%s1] sm:$0xff]
    %552 = vset.pattern.permute.xlu0 0
    %553 = vperm.xlu0 %552, %v550
    %v554 = vpop.permute.xlu0 %553
    %v556 = vlaneseq
    %v557 = vshrl.u32 %v556, 7
    %v558 = vsub.s32 0, %v557
    %v559 = vrot.slane %v56, %v558
    %v560 = vmul.f32 %v554, %v559
    %562 = vrot.lane.b32.xlu0 %v549, 32
    %v563 = vpop.permute.xlu0 %562
    %v564 = vsel %vm151, %v563, 0
    %566 = vmatprep.subr.mxu0 0.0
    %567 = vmatpush1.msra.mxu0 %v52
    %568 = vmatprep.subr.mxu0 0.0
    %569 = vmatpush1.msra.mxu0 %v53
    %570 = vmatprep.subr.mxu0 0.0
    %571 = vmatpush1.msra.mxu0 %v54
    %572 = vmatprep.subr.mxu0 0.0
    %573 = vmatpush1.msra.mxu0 %v55
    %574 = vmatprep.subr.mxu0 0.0
    %575 = vmatpush1.msra.mxu0 0.0
    %576 = vmatprep.subr.mxu0 0.0
    %577 = vmatpush1.msra.mxu0 0.0
    %578 = vmatprep.subr.mxu0 0.0
    %579 = vmatpush1.msra.mxu0 0.0
    %580 = vmatprep.subr.mxu0 0.0
    %581 = vmatpush1.msra.mxu0 0.0
    %582 = vmatprep.subr.mxu0 0.0
    %583 = vmatpush1.msra.mxu0 0.0
    %584 = vmatprep.subr.mxu0 0.0
    %585 = vmatpush1.msra.mxu0 0.0
    %586 = vmatprep.subr.mxu0 0.0
    %587 = vmatpush1.msra.mxu0 0.0
    %588 = vmatprep.subr.mxu0 0.0
    %589 = vmatpush1.msra.mxu0 0.0
    %590 = vmatprep.subr.mxu0 0.0
    %591 = vmatpush1.msra.mxu0 0.0
    %592 = vmatprep.subr.mxu0 0.0
    %593 = vmatpush1.msra.mxu0 0.0
    %594 = vmatprep.subr.mxu0 0.0
    %595 = vmatpush1.msra.mxu0 0.0
    %596 = vmatprep.subr.mxu0 0.0
    %597 = vmatpush1.msra.mxu0 0.0
    %598 = vmatprep.subr.mxu0 0.0
    %599 = vmatpush1.msra.mxu0 0.0
    %600 = vmatprep.subr.mxu0 0.0
    %601 = vmatpush1.msra.mxu0 0.0
    %602 = vmatprep.subr.mxu0 0.0
    %603 = vmatpush1.msra.mxu0 0.0
    %604 = vmatprep.subr.mxu0 0.0
    %605 = vmatpush1.msra.mxu0 0.0
    %606 = vmatprep.subr.mxu0 0.0
    %607 = vmatpush1.msra.mxu0 0.0
    %608 = vmatprep.subr.mxu0 0.0
    %609 = vmatpush1.msra.mxu0 0.0
    %610 = vmatprep.subr.mxu0 0.0
    %611 = vmatpush1.msra.mxu0 0.0
    %612 = vmatprep.subr.mxu0 0.0
    %613 = vmatpush1.msra.mxu0 0.0
    %614 = vmatprep.subr.mxu0 0.0
    %615 = vmatpush1.msra.mxu0 0.0
    %616 = vmatprep.subr.mxu0 0.0
    %617 = vmatpush1.msra.mxu0 0.0
    %618 = vmatprep.subr.mxu0 0.0
    %619 = vmatpush1.msra.mxu0 0.0
    %620 = vmatprep.subr.mxu0 0.0
    %621 = vmatpush1.msra.mxu0 0.0
    %622 = vmatprep.subr.mxu0 0.0
    %623 = vmatpush1.msra.mxu0 0.0
    %624 = vmatprep.subr.mxu0 0.0
    %625 = vmatpush1.msra.mxu0 0.0
    %626 = vmatprep.subr.mxu0 0.0
    %627 = vmatpush1.msra.mxu0 0.0
    %628 = vmatprep.subr.mxu0 0.0
    %629 = vmatpush1.msra.mxu0 0.0
    %630 = vmatprep.mubr.f32.mxu0 0.0
    %631 = vmatmul.mubr.f32.gmra.mrb[0].mxu0 %v564
    %v632 = vpop.f32.mrb[0].mxu0
    %v633 = vadd.f32 0.0, %v632
    %v634 = vpop.f32.mrb[0].mxu0
    %635 = vdwg.mxu0
    %v636 = vadd.f32 %v560, %v633
    %v637 = vlaneseq
    %v638 = vshrl.u32 %v637, 7
    %v639 = vsub.s32 0, %v638
    %v640 = vrot.slane %v57, %v639
    %v641 = vadd.f32 %v636, %v640
    %v642 = vxor.u32 %v641, 2147483648
    %v643 = vmul.f32 %v642, 1.442695
    %v644 = vpow.pop %v643
    %v645 = vadd.f32 %v644, 1.0
    %v646 = vrcp.pop %v645
    %v647 = vmul.f32 1.0, %v646
    %v648 = vtanh.pop %v641
    %v649 = vmul.f32 %v647, %v543
    %651 = vrot.lane.b32.xlu0 %v648, 64
    %v652 = vpop.permute.xlu0 %651
    %v654 = vmul.f32 %v647, %v652
    %656 = vrot.lane.b32.xlu0 %v654, 32
    %v657 = vpop.permute.xlu0 %656
    %v659 = vadd.f32 %v649, %v657
    %v660 = vtanh.pop %v659
    %662 = vrot.lane.b32.xlu0 %v660, 64
    %v663 = vpop.permute.xlu0 %662
    %v665 = vmul.f32 %v647, %v663
    %v666 = vmul.f32 %v249, %v665
    %668 = vrot.lane.b32.xlu0 %v666, 32
    %v669 = vpop.permute.xlu0 %668
    %v671 = vsel %vm151, %v669, 0.0
    %672 = vadd.xlane.f32.xlu0 %v671
    %v673 = vpop.xlane.xlu0 %672
    %v674 = vmul.f32 %v349, %v665
    %676 = vrot.lane.b32.xlu0 %v674, 32
    %v677 = vpop.permute.xlu0 %676
    %v679 = vsel %vm151, %v677, 0.0
    %680 = vadd.xlane.f32.xlu0 %v679
    %v681 = vpop.xlane.xlu0 %680
    %v682 = vmul.f32 %v449, %v665
    %684 = vrot.lane.b32.xlu0 %v682, 32
    %v685 = vpop.permute.xlu0 %684
    %v687 = vsel %vm151, %v685, 0.0
    %688 = vadd.xlane.f32.xlu0 %v687
    %v689 = vpop.xlane.xlu0 %688
    %v690 = vmul.f32 %v549, %v665
    %692 = vrot.lane.b32.xlu0 %v690, 32
    %v693 = vpop.permute.xlu0 %692
    %v695 = vsel %vm151, %v693, 0.0
    %696 = vadd.xlane.f32.xlu0 %v695
    %v697 = vpop.xlane.xlu0 %696
    %v698 = vmax.f32 %v673, %v681
    %v699 = vmax.f32 %v698, %v689
    %v700 = vmax.f32 %v699, %v697
    %v701 = vsub.f32 %v673, %v700
    %v702 = vmul.f32 %v701, 1.442695
    %v703 = vpow.pop %v702
    %v704 = vsub.f32 %v681, %v700
    %v705 = vmul.f32 %v704, 1.442695
    %v706 = vpow.pop %v705
    %v707 = vsub.f32 %v689, %v700
    %v708 = vmul.f32 %v707, 1.442695
    %v709 = vpow.pop %v708
    %v710 = vsub.f32 %v697, %v700
    %v711 = vmul.f32 %v710, 1.442695
    %v712 = vpow.pop %v711
    %v713 = vadd.f32 %v703, %v706
    %v714 = vadd.f32 %v713, %v709
    %v715 = vadd.f32 %v714, %v712
    %v716 = vrcp.pop %v715
    %v717 = vmul.f32 %v703, %v716
    %v718 = vmul.f32 %v717, %v249
    %v719 = vadd.f32 %v718, 0.0
    %v720 = vmul.f32 %v706, %v716
    %v721 = vmul.f32 %v720, %v349
    %v722 = vadd.f32 %v719, %v721
    %v723 = vmul.f32 %v709, %v716
    %v724 = vmul.f32 %v723, %v449
    %v725 = vadd.f32 %v722, %v724
    %v726 = vmul.f32 %v712, %v716
    %v727 = vmul.f32 %v726, %v549
    %v728 = vadd.f32 %v725, %v727
    %v729 = vld [vmem:[%s3] sm:$0xff]
    %v730 = vld [vmem:[%s3 + $0x8] sm:$0xff]
    %v731 = vld [vmem:[%s3 + $0x10] sm:$0xff]
    %v732 = vld [vmem:[%s3 + $0x18] sm:$0xff]
    %v733 = vld [vmem:[%s3 + $0x20] sm:$0xff]
    %v734 = vld [vmem:[%s3 + $0x28] sm:$0xff]
    %v735 = vld [vmem:[%s3 + $0x30] sm:$0xff]
    %v736 = vld [vmem:[%s3 + $0x38] sm:$0xff]
    %v737 = vld [vmem:[%s3 + $0x40] sm:$0x1]
    %v738 = vld [vmem:[%s3 + $0x48] sm:$0x1]
    %v739 = vld [vmem:[%s3 + $0x50] sm:$0x1]
    %741 = vrot.lane.b32.xlu0 %v665, 32
    %v742 = vpop.permute.xlu0 %741
    %v743 = vsel %vm151, %v742, 0
    %745 = vmatprep.subr.mxu0 0.0
    %746 = vmatpush1.msra.mxu0 %v733
    %747 = vmatprep.subr.mxu0 0.0
    %748 = vmatpush1.msra.mxu0 %v734
    %749 = vmatprep.subr.mxu0 0.0
    %750 = vmatpush1.msra.mxu0 %v735
    %751 = vmatprep.subr.mxu0 0.0
    %752 = vmatpush1.msra.mxu0 %v736
    %753 = vmatprep.subr.mxu0 0.0
    %754 = vmatpush1.msra.mxu0 0.0
    %755 = vmatprep.subr.mxu0 0.0
    %756 = vmatpush1.msra.mxu0 0.0
    %757 = vmatprep.subr.mxu0 0.0
    %758 = vmatpush1.msra.mxu0 0.0
    %759 = vmatprep.subr.mxu0 0.0
    %760 = vmatpush1.msra.mxu0 0.0
    %761 = vmatprep.subr.mxu0 0.0
    %762 = vmatpush1.msra.mxu0 0.0
    %763 = vmatprep.subr.mxu0 0.0
    %764 = vmatpush1.msra.mxu0 0.0
    %765 = vmatprep.subr.mxu0 0.0
    %766 = vmatpush1.msra.mxu0 0.0
    %767 = vmatprep.subr.mxu0 0.0
    %768 = vmatpush1.msra.mxu0 0.0
    %769 = vmatprep.subr.mxu0 0.0
    %770 = vmatpush1.msra.mxu0 0.0
    %771 = vmatprep.subr.mxu0 0.0
    %772 = vmatpush1.msra.mxu0 0.0
    %773 = vmatprep.subr.mxu0 0.0
    %774 = vmatpush1.msra.mxu0 0.0
    %775 = vmatprep.subr.mxu0 0.0
    %776 = vmatpush1.msra.mxu0 0.0
    %777 = vmatprep.subr.mxu0 0.0
    %778 = vmatpush1.msra.mxu0 0.0
    %779 = vmatprep.subr.mxu0 0.0
    %780 = vmatpush1.msra.mxu0 0.0
    %781 = vmatprep.subr.mxu0 0.0
    %782 = vmatpush1.msra.mxu0 0.0
    %783 = vmatprep.subr.mxu0 0.0
    %784 = vmatpush1.msra.mxu0 0.0
    %785 = vmatprep.subr.mxu0 0.0
    %786 = vmatpush1.msra.mxu0 0.0
    %787 = vmatprep.subr.mxu0 0.0
    %788 = vmatpush1.msra.mxu0 0.0
    %789 = vmatprep.subr.mxu0 0.0
    %790 = vmatpush1.msra.mxu0 0.0
    %791 = vmatprep.subr.mxu0 0.0
    %792 = vmatpush1.msra.mxu0 0.0
    %793 = vmatprep.subr.mxu0 0.0
    %794 = vmatpush1.msra.mxu0 0.0
    %795 = vmatprep.subr.mxu0 0.0
    %796 = vmatpush1.msra.mxu0 0.0
    %797 = vmatprep.subr.mxu0 0.0
    %798 = vmatpush1.msra.mxu0 0.0
    %799 = vmatprep.subr.mxu0 0.0
    %800 = vmatpush1.msra.mxu0 0.0
    %801 = vmatprep.subr.mxu0 0.0
    %802 = vmatpush1.msra.mxu0 0.0
    %803 = vmatprep.subr.mxu0 0.0
    %804 = vmatpush1.msra.mxu0 0.0
    %805 = vmatprep.subr.mxu0 0.0
    %806 = vmatpush1.msra.mxu0 0.0
    %807 = vmatprep.subr.mxu0 0.0
    %808 = vmatpush1.msra.mxu0 0.0
    %809 = vmatprep.mubr.f32.mxu0 0.0
    %810 = vmatmul.mubr.f32.gmra.mrb[0].mxu0 %v743
    %v811 = vpop.f32.mrb[0].mxu0
    %v812 = vadd.f32 0.0, %v811
    %v813 = vpop.f32.mrb[0].mxu0
    %814 = vdwg.mxu0
    %816 = vrot.lane.b32.xlu0 %v728, 32
    %v817 = vpop.permute.xlu0 %816
    %v818 = vsel %vm151, %v817, 0
    %820 = vmatprep.subr.mxu0 0.0
    %821 = vmatpush1.msra.mxu0 %v729
    %822 = vmatprep.subr.mxu0 0.0
    %823 = vmatpush1.msra.mxu0 %v730
    %824 = vmatprep.subr.mxu0 0.0
    %825 = vmatpush1.msra.mxu0 %v731
    %826 = vmatprep.subr.mxu0 0.0
    %827 = vmatpush1.msra.mxu0 %v732
    %828 = vmatprep.subr.mxu0 0.0
    %829 = vmatpush1.msra.mxu0 0.0
    %830 = vmatprep.subr.mxu0 0.0
    %831 = vmatpush1.msra.mxu0 0.0
    %832 = vmatprep.subr.mxu0 0.0
    %833 = vmatpush1.msra.mxu0 0.0
    %834 = vmatprep.subr.mxu0 0.0
    %835 = vmatpush1.msra.mxu0 0.0
    %836 = vmatprep.subr.mxu0 0.0
    %837 = vmatpush1.msra.mxu0 0.0
    %838 = vmatprep.subr.mxu0 0.0
    %839 = vmatpush1.msra.mxu0 0.0
    %840 = vmatprep.subr.mxu0 0.0
    %841 = vmatpush1.msra.mxu0 0.0
    %842 = vmatprep.subr.mxu0 0.0
    %843 = vmatpush1.msra.mxu0 0.0
    %844 = vmatprep.subr.mxu0 0.0
    %845 = vmatpush1.msra.mxu0 0.0
    %846 = vmatprep.subr.mxu0 0.0
    %847 = vmatpush1.msra.mxu0 0.0
    %848 = vmatprep.subr.mxu0 0.0
    %849 = vmatpush1.msra.mxu0 0.0
    %850 = vmatprep.subr.mxu0 0.0
    %851 = vmatpush1.msra.mxu0 0.0
    %852 = vmatprep.subr.mxu0 0.0
    %853 = vmatpush1.msra.mxu0 0.0
    %854 = vmatprep.subr.mxu0 0.0
    %855 = vmatpush1.msra.mxu0 0.0
    %856 = vmatprep.subr.mxu0 0.0
    %857 = vmatpush1.msra.mxu0 0.0
    %858 = vmatprep.subr.mxu0 0.0
    %859 = vmatpush1.msra.mxu0 0.0
    %860 = vmatprep.subr.mxu0 0.0
    %861 = vmatpush1.msra.mxu0 0.0
    %862 = vmatprep.subr.mxu0 0.0
    %863 = vmatpush1.msra.mxu0 0.0
    %864 = vmatprep.subr.mxu0 0.0
    %865 = vmatpush1.msra.mxu0 0.0
    %866 = vmatprep.subr.mxu0 0.0
    %867 = vmatpush1.msra.mxu0 0.0
    %868 = vmatprep.subr.mxu0 0.0
    %869 = vmatpush1.msra.mxu0 0.0
    %870 = vmatprep.subr.mxu0 0.0
    %871 = vmatpush1.msra.mxu0 0.0
    %872 = vmatprep.subr.mxu0 0.0
    %873 = vmatpush1.msra.mxu0 0.0
    %874 = vmatprep.subr.mxu0 0.0
    %875 = vmatpush1.msra.mxu0 0.0
    %876 = vmatprep.subr.mxu0 0.0
    %877 = vmatpush1.msra.mxu0 0.0
    %878 = vmatprep.subr.mxu0 0.0
    %879 = vmatpush1.msra.mxu0 0.0
    %880 = vmatprep.subr.mxu0 0.0
    %881 = vmatpush1.msra.mxu0 0.0
    %882 = vmatprep.subr.mxu0 0.0
    %883 = vmatpush1.msra.mxu0 0.0
    %884 = vmatprep.mubr.f32.mxu0 0.0
    %885 = vmatmul.mubr.f32.gmra.mrb[0].mxu0 %v818
    %v886 = vpop.f32.mrb[0].mxu0
    %v887 = vadd.f32 %v812, %v886
    %v888 = vpop.f32.mrb[0].mxu0
    %889 = vdwg.mxu0
    %v890 = vlaneseq
    %v891 = vshrl.u32 %v890, 7
    %v892 = vsub.s32 0, %v891
    %v893 = vrot.slane %v737, %v892
    %v894 = vadd.f32 %v887, %v893
    %v895 = vtanh.pop %v894
    %v896 = vlaneseq
    %v897 = vshrl.u32 %v896, 7
    %v898 = vsub.s32 0, %v897
    %v899 = vrot.slane %v738, %v898
    %v900 = vmul.f32 %v895, %v899
    %v901 = vsel %vm151, %v900, 0.0
    %902 = vadd.xlane.f32.xlu0 %v901
    %v903 = vpop.xlane.xlu0 %902
    %v904 = vlaneseq
    %v905 = vshrl.u32 %v904, 7
    %v906 = vsub.s32 0, %v905
    %v907 = vrot.slane %v739, %v906
    %v908 = vadd.f32 %v903, %v907
    %v909 = vsub.f32 %v908, %v908
    %v910 = vmul.f32 %v909, 1.442695
    %v911 = vpow.pop %v910
    %v912 = vadd.f32 %v911, 0.0
    %v913 = vlog2.pop %v912
    %v914 = vmul.f32 %v913, 0.6931472
    %v915 = vadd.f32 %v908, %v914
    %v916 = vsub.f32 %v908, %v915
    %vm917 = vcmask 7168
    %918 = vst.msk [vmem:[%s4] sm:$0xff] %vm917, %v916
    // Predicated region
    $region22: #{tpu_custom_call.1} parent=1 // pred_check
      _
    $region23: #{tpu_custom_call.1} parent=1 // pred_check_branch
      %920 = sbr.rel (0) target = $region25
    $region24: #{tpu_custom_call.1} parent=1 // pred_region
      _
    $region25: #{tpu_custom_call.1} parent=1 // pred_fallthru
      _
    // Predicated region
    $region26: #{tpu_custom_call.1} parent=1 // pred_check
      _
    $region27: #{tpu_custom_call.1} parent=1 // pred_check_branch
      %922 = sbr.rel (0) target = $region29
    $region28: #{tpu_custom_call.1} parent=1 // pred_region
      _
    $region29: #{tpu_custom_call.1} parent=1 // pred_fallthru
      _
    %923 = vsyncpa [#allocation3], 1

</llo_original>
